<compile_context>
chip_gen: v7x
topology: tpu7x:2x2x1
jax: 0.10.0
libtpu: 0.0.40
codegen_flags: <defaults>
</compile_context>

<pallas_src>
import functools
import math

import jax
import jax.numpy as jnp
from jax import lax
from jax.experimental import pallas as pl
from jax.experimental.pallas import tpu as pltpu

EARTH_R = 6371000.0
DEG2RAD = math.pi / 180.0

_LANES = 512              # lane width of each tile (multiple of 128)
_DEF_TILE_ROWS = 256      # sublane rows per tile (multiple of 8)
_MIN_POINTS_FOR_PALLAS = 65536


def _a_threshold(error: float) -> float:
    # dis < error  <=>  a < sin(error / (2R))^2   (2R*arcsin(sqrt(a)) is monotone in a)
    if error <= 0.0:
        return -math.inf          # nothing has distance < a non-positive radius
    if error > math.pi * EARTH_R:
        return math.inf           # everything (even exactly antipodal points) is a hit
    return math.sin(error / (2.0 * EARTH_R)) ** 2


def _roll_probe_kernel(x_ref, o_ref):
    o_ref[...] = pltpu.roll(x_ref[...], 1, axis=1)


@functools.lru_cache(maxsize=None)
def _prev_lane_shift(length: int) -> int:
    """Static shift s such that pltpu.roll(x, s, axis=-1)[..., j] == x[..., j-1].

    jnp.roll semantics give s == 1; this one-off probe kernel guards against the
    opposite rotate convention so the lon/lat pairing is always correct.
    """
    lane = jnp.broadcast_to(jnp.arange(128, dtype=jnp.float32), (8, 128))
    rolled = pl.pallas_call(
        _roll_probe_kernel,
        out_shape=jax.ShapeDtypeStruct((8, 128), jnp.float32),
        in_specs=[pl.BlockSpec(memory_space=pltpu.MemorySpace.VMEM)],
        out_specs=pl.BlockSpec(memory_space=pltpu.MemorySpace.VMEM),
    )(lane)
    return 1 if float(rolled[0, 1]) == 0.0 else length - 1


def _make_kernel(*, tile_rows, lanes, total, a_thresh, inv_n, prev_shift):
    def kernel(p_ref, t_ref, acc_out_ref, acc_scratch):
        step = pl.program_id(0)
        nsteps = pl.num_programs(0)

        @pl.when(step == 0)
        def _init():
            acc_scratch[...] = jnp.zeros_like(acc_scratch)

        # interleaved [lon, lat, lon, lat, ...] along lanes, already float32
        p = p_ref[...] * DEG2RAD
        t = t_ref[...] * DEG2RAD

        d_half = (t - p) * 0.5
        s = jnp.sin(d_half)
        s2 = s * s                                   # sin^2(d/2) at every lane
        # cos(lat1)*cos(lat2) == 0.5*(cos(lat1+lat2) + 1) - sin^2(dlat/2)
        cc = 0.5 * (jnp.cos(p + t) + 1.0) - s2

        # At a lat lane (odd flat index): s2 = sin^2(dlat/2), cc = cos(lat1)cos(lat2),
        # and the lon term sin^2(dlon/2) lives one lane to the left.
        s2_lon = pltpu.roll(s2, prev_shift, axis=1)
        a = s2 + cc * s2_lon                         # haversine 'a', valid at lat lanes

        row = lax.broadcasted_iota(jnp.int32, (tile_rows, lanes), 0)
        col = lax.broadcasted_iota(jnp.int32, (tile_rows, lanes), 1)
        flat = (step * tile_rows + row) * lanes + col
        is_lat_lane = (col & 1) == 1
        valid = jnp.logical_and(is_lat_lane, flat < total)   # masks padding + OOB tile rows
        hit = jnp.logical_and(valid, a < a_thresh)

        acc_scratch[...] += hit.astype(jnp.float32)

        @pl.when(step == nsteps - 1)
        def _finalize():
            acc_out_ref[0, 0] = jnp.sum(acc_scratch[...]) * inv_n

    return kernel


def _pallas_accuracy(preds, trues, error, *, tile_rows=_DEF_TILE_ROWS):
    B, N, _ = preds.shape
    n_points = B * N
    total = 2 * n_points
    lanes = _LANES

    # natural row-major flatten keeps the [lon, lat, ...] interleave; reshape is free
    p = preds.astype(jnp.float32).reshape(-1)
    t = trues.astype(jnp.float32).reshape(-1)

    rows = max(pl.cdiv(total, lanes), 8)
    padded = rows * lanes
    if padded != total:
        p = jnp.pad(p, (0, padded - total))
        t = jnp.pad(t, (0, padded - total))
    p = p.reshape(rows, lanes)
    t = t.reshape(rows, lanes)

    tile_rows = min(tile_rows, rows)
    assert tile_rows % 8 == 0 or tile_rows == rows, (tile_rows, rows)
    grid = pl.cdiv(rows, tile_rows)

    kernel = _make_kernel(
        tile_rows=tile_rows, lanes=lanes, total=total,
        a_thresh=_a_threshold(float(error)), inv_n=1.0 / float(n_points),
        prev_shift=_prev_lane_shift(lanes))

    acc = pl.pallas_call(
        kernel,
        out_shape=jax.ShapeDtypeStruct((1, 1), jnp.float32),
        grid_spec=pltpu.PrefetchScalarGridSpec(
            num_scalar_prefetch=0,
            grid=(grid,),
            in_specs=[pl.BlockSpec((tile_rows, lanes), lambda i: (i, 0)),
                      pl.BlockSpec((tile_rows, lanes), lambda i: (i, 0))],
            out_specs=pl.BlockSpec((1, 1), lambda i: (0, 0),
                                   memory_space=pltpu.MemorySpace.SMEM),
            scratch_shapes=[pltpu.VMEM((tile_rows, lanes), jnp.float32)]),
        compiler_params=pltpu.CompilerParams(
            dimension_semantics=("arbitrary",)),
    )(p, t)
    return acc[0, 0]


def _reference_accuracy(preds, trues, error):
    """Pure-JAX transcription of the PyTorch/numpy forward pass (also the small-size path)."""
    lon1 = preds[:, :, 0].astype(jnp.float32) * DEG2RAD
    lat1 = preds[:, :, 1].astype(jnp.float32) * DEG2RAD
    lon2 = trues[:, :, 0].astype(jnp.float32) * DEG2RAD
    lat2 = trues[:, :, 1].astype(jnp.float32) * DEG2RAD
    dlon = lon2 - lon1
    dlat = lat2 - lat1
    a = jnp.sin(dlat / 2) ** 2 + jnp.cos(lat1) * jnp.cos(lat2) * jnp.sin(dlon / 2) ** 2
    c = 2.0 * jnp.arcsin(jnp.sqrt(a))
    dis = c * EARTH_R
    return jnp.mean((dis < error).astype(jnp.float32))


def calculate_accuracy(preds, trues, error, *, use_pallas=None, tile_rows=_DEF_TILE_ROWS):
    """Pallas equivalent of Calculate_accuracy(error)(preds, trues) -> scalar acc."""
    B, N, _ = preds.shape
    if use_pallas is None:
        # tiny problems: fused XLA elementwise+reduce beats the pallas_call launch overhead
        use_pallas = (B * N) >= _MIN_POINTS_FOR_PALLAS
    if not use_pallas:
        return _reference_accuracy(preds, trues, error)
    return _pallas_accuracy(preds, trues, float(error), tile_rows=tile_rows)


if __name__ == "__main__":
    error = 300000.0  # 300 km

    # Case 1: small shape from the module spec (single padded (8, 512) tile, grid = 1).
    key = jax.random.PRNGKey(0)
    k1, k2, k3 = jax.random.split(key, 3)
    B, N = 2, 128
    lon = jax.random.uniform(k1, (B, N), minval=-180.0, maxval=180.0)
    lat = jax.random.uniform(k2, (B, N), minval=-90.0, maxval=90.0)
    preds = jnp.stack([lon, lat], axis=-1).astype(jnp.float32)
    noise = jax.random.uniform(k3, (B, N, 2), minval=-5.0, maxval=5.0)
    trues = (preds + noise).astype(jnp.float32)

    acc = jax.block_until_ready(calculate_accuracy(preds, trues, error, use_pallas=True))
    ref = jax.block_until_ready(_reference_accuracy(preds, trues, error))
    assert abs(float(acc) - float(ref)) < 1e-6, (float(acc), float(ref))

    # Case 2: multi-step grid + partial last block + padding (tile_rows=8 forces grid > 1).
    k4, k5, k6 = jax.random.split(jax.random.PRNGKey(1), 3)
    B2, N2 = 3, 1000
    lon2 = jax.random.uniform(k4, (B2, N2), minval=-180.0, maxval=180.0)
    lat2 = jax.random.uniform(k5, (B2, N2), minval=-90.0, maxval=90.0)
    preds2 = jnp.stack([lon2, lat2], axis=-1).astype(jnp.float32)
    trues2 = (preds2 + jax.random.uniform(k6, (B2, N2, 2), minval=-5.0, maxval=5.0)
              ).astype(jnp.float32)

    acc2 = jax.block_until_ready(
        calculate_accuracy(preds2, trues2, error, use_pallas=True, tile_rows=8))
    ref2 = jax.block_until_ready(_reference_accuracy(preds2, trues2, error))
    assert abs(float(acc2) - float(ref2)) < 1e-6, (float(acc2), float(ref2))

    print("KERNEL_OK")
</pallas_src>

<mosaic_0001>
module attributes {stable_mosaic.version = 11 : i64} {
  func.func @_roll_probe_kernel(%arg0: memref<8x128xf32, #tpu.memory_space<vmem>>, %arg1: memref<8x128xf32, #tpu.memory_space<vmem>>) attributes {dimension_semantics = [], scalar_prefetch = 0 : i64, scratch_operands = 0 : i64, tpu.core_type = #tpu.core_type<tc>} {
    %c0 = arith.constant 0 : index
    %c0_0 = arith.constant 0 : index
    %0 = vector.load %arg0[%c0, %c0_0] : memref<8x128xf32, #tpu.memory_space<vmem>>, vector<8x128xf32>
    %c1_i32 = arith.constant 1 : i32
    %1 = tpu.dynamic_rotate %0 by %c1_i32 dim 1 : vector<8x128xf32>, i32 -> vector<8x128xf32>
    %c0_1 = arith.constant 0 : index
    %c0_2 = arith.constant 0 : index
    %2 = vector.load %arg1[%c0_1, %c0_2] : memref<8x128xf32, #tpu.memory_space<vmem>>, vector<8x128xf32>
    tpu.vector_store %arg1[%c0_1, %c0_2], %1 {strides = array<i32>} : memref<8x128xf32, #tpu.memory_space<vmem>>, vector<8x128xf32>,
    return
  }
}

</mosaic_0001>

<llo_original>
// kernel: tpu_custom_call.1
$region0: #{tpu_custom_call.1}
  #allocation0 [shape = 'u32[]', space=smem, size = 0x4, offset = 0x4, fixed_abs, tag = 'smem constant byte address 0x4 - core index']
  #allocation1 [shape = 'u32[144,128]{1,0:T(1,128)}', space=vmem, size = 0x12000, scoped, tag = 'internal scratch']
  %s0 = inlined_call_operand.hbm [shape: f32[8,128], index: 0, kind: input, shape index: {}]
  %s1 = inlined_call_operand.hbm [shape: f32[8,128], index: 1, kind: output, shape index: {}]
  %s2 = sld [smem:[#allocation0]]
  $region18: #{tpu_custom_call.1} parent=0
    _
  %s4 = ssub.s32 1, %s2
  %s5 = scalar_select 0, %s4, %s2
  $region1: #{tpu_custom_call.1} parent=0
    #allocation2 [shape = 'u8[4096]{0}', space=vmem, size = 0x1000, scoped, tag = 'input window, operand 0, single buffered']
    #allocation3 [shape = 's32[1]{0}', space=sflag, size = 0x4, scoped, tag = 'scoped memory for tpu_custom_call.1']
    #allocation4 [shape = 's32[1]{0}', space=sflag, size = 0x4, scoped, tag = 'scoped memory for tpu_custom_call.1']
    #allocation5 [shape = 'u8[4096]{0}', space=vmem, size = 0x1000, scoped, tag = 'output window, operand 0, single buffered']
    %6 = vsyncpa [#allocation3], 0
    %7 = vsyncpa [#allocation4], 0
    // Predicated region
    $region2: #{tpu_custom_call.1} parent=1 // pred_check
      _
    $region3: #{tpu_custom_call.1} parent=1 // pred_check_branch
      %9 = sbr.rel (0) target = $region5
    $region4: #{tpu_custom_call.1} parent=1 // pred_region
      %s11 = ssub.s32 128, 128
      %12 = vsyncadd [#allocation3], %s11
      %s14 = sshll.u32 [#allocation2], 4
      %s15 = int_to_ptr.vmem [resolvable:$true] %s14
      %17 = dma.hbm_to_vmem [thread:$0]  %s0, 128, %s15, [#allocation3]
    $region5: #{tpu_custom_call.1} parent=1 // pred_fallthru
      _
    // Predicated region
    $region6: #{tpu_custom_call.1} parent=1 // pred_check
      _
    $region7: #{tpu_custom_call.1} parent=1 // pred_check_branch
      %19 = sbr.rel (0) target = $region9
    $region8: #{tpu_custom_call.1} parent=1 // pred_region
      %20 = dma.done [#allocation3], 128
    $region9: #{tpu_custom_call.1} parent=1 // pred_fallthru
      _
    %v21 = vld [vmem:[#allocation2] sm:$0xff]
    %22 = vrot.lane.b32.xlu0 %v21, 1
    %v23 = vpop.permute.xlu0 %22
    %24 = vst [vmem:[#allocation5] sm:$0xff] %v23
    // Predicated region
    $region10: #{tpu_custom_call.1} parent=1 // pred_check
      _
    $region11: #{tpu_custom_call.1} parent=1 // pred_check_branch
      %26 = sbr.rel (0) target = $region13
    $region12: #{tpu_custom_call.1} parent=1 // pred_region
      %s28 = ssub.s32 128, 128
      %29 = vsyncadd [#allocation4], %s28
      %s31 = sshll.u32 [#allocation5], 4
      %s32 = int_to_ptr.vmem [resolvable:$true] %s31
      %34 = dma.vmem_to_hbm [thread:$0]  %s32, 128, %s1, [#allocation4]
    $region13: #{tpu_custom_call.1} parent=1 // pred_fallthru
      _
    // Predicated region
    $region14: #{tpu_custom_call.1} parent=1 // pred_check
      _
    $region15: #{tpu_custom_call.1} parent=1 // pred_check_branch
      %36 = sbr.rel (0) target = $region17
    $region16: #{tpu_custom_call.1} parent=1 // pred_region
      %37 = dma.done [#allocation4], 128
    $region17: #{tpu_custom_call.1} parent=1 // pred_fallthru
      _
    %38 = vsyncpa [#allocation3], 1
    %39 = vsyncpa [#allocation4], 1

</llo_original>
